<compile_context>
chip_gen: v7x
topology: tpu7x:2x2x1
jax: 0.10.0
libtpu: 0.0.40
codegen_flags: <defaults>
</compile_context>

<pallas_src>
import functools

import jax
import jax.numpy as jnp
from jax.experimental import pallas as pl
from jax.experimental.pallas import tpu as pltpu


def _round_up(x, m):
    return (x + m - 1) // m * m


def _mics_head_kernel(temperature, eps, feat_ref, wt_ref, out_ref):
    # feat_ref: [TB, HW, C] channels-last encoder features
    # wt_ref:   [C, NCp]    fc.weight^T, classes zero-padded to a 128-multiple
    # out_ref:  [TB, NCp]   logits (lane-dense)
    f32 = jnp.float32

    # adaptive_avg_pool2d(., 1).squeeze == mean over HW; the 1/HW factor cancels
    # exactly under the subsequent L2 normalization, so a plain sum suffices.
    feats = feat_ref[...].astype(f32)
    pooled = jnp.sum(feats, axis=1)                                   # [TB, C]

    # F.normalize(x, p=2, dim=-1): x / max(||x||, eps) == x * rsqrt(max(||x||^2, eps^2))
    f_ss = jnp.sum(pooled * pooled, axis=-1, keepdims=True)           # [TB, 1]
    f_hat = pooled * jax.lax.rsqrt(jnp.maximum(f_ss, eps * eps))      # [TB, C]

    # F.normalize(fc.weight, dim=-1) per class (columns of w^T), with the
    # temperature scale folded into the (small) per-class factor.
    w = wt_ref[...].astype(f32)                                       # [C, NCp]
    w_ss = jnp.sum(w * w, axis=0, keepdims=True)                      # [1, NCp]
    w_hat = w * (temperature * jax.lax.rsqrt(jnp.maximum(w_ss, eps * eps)))

    # MXU matmul: [TB, C] x [C, NCp] -> [TB, NCp]; if the encoder features are
    # bf16 we feed the MXU its native bf16 path (f32 accumulation either way).
    mxu_dtype = jnp.bfloat16 if feat_ref.dtype == jnp.bfloat16 else f32
    out_ref[...] = jnp.dot(
        f_hat.astype(mxu_dtype),
        w_hat.astype(mxu_dtype),
        preferred_element_type=jnp.float32,
    ).astype(out_ref.dtype)


def mics_forward(x_nchw, fc_weight, temperature, *, eps=1e-12):
    """MICS.forward for 4-D input (mode != 'encoder'), from encoder features on."""
    B, C, H, W = x_nchw.shape
    num_classes, num_features = fc_weight.shape
    assert C == num_features, "channel dim must equal args.num_features"
    HW = H * W

    # ---- layout plumbing (HBM-side, free) ----
    # channels-last features so C is on lanes; weight transposed to [C, NC].
    feats = jnp.transpose(x_nchw.reshape(B, C, HW), (0, 2, 1))        # [B, HW, C]
    w_t = jnp.transpose(fc_weight)                                    # [C, NC]

    # lane-dense output: pad classes to a multiple of 128 (sliced back below).
    nc_pad = _round_up(num_classes, 128)
    if nc_pad != num_classes:
        w_t = jnp.pad(w_t, ((0, 0), (0, nc_pad - num_classes)))

    # batch tiling: 8-sublane aligned, capped at 128 rows so an f32 feature
    # tile (TILE_B * HW * C * 4B, double-buffered) fits v7x's smaller VMEM.
    tile_b = min(128, _round_up(B, 8))
    b_pad = _round_up(B, tile_b)
    if b_pad != B:
        feats = jnp.pad(feats, ((0, b_pad - B), (0, 0), (0, 0)))

    kernel = functools.partial(_mics_head_kernel, float(temperature), float(eps))

    out = pl.pallas_call(
        kernel,
        out_shape=jax.ShapeDtypeStruct((b_pad, nc_pad), jnp.float32),
        grid=(b_pad // tile_b,),
        in_specs=[
            pl.BlockSpec((tile_b, HW, C), lambda i: (i, 0, 0)),       # batch-tiled features
            pl.BlockSpec((C, nc_pad), lambda i: (0, 0)),              # resident weight block
        ],
        out_specs=pl.BlockSpec((tile_b, nc_pad), lambda i: (i, 0)),
        compiler_params=pltpu.CompilerParams(
            dimension_semantics=("parallel",),                        # shard batch blocks across TCs (v7x)
        ),
    )(feats, w_t)

    return out[:B, :num_classes]


def orthogonal_init(key, shape):
    """Deterministic nn.init.orthogonal_ equivalent for a [rows, cols] weight."""
    rows, cols = shape
    n, m = max(rows, cols), min(rows, cols)
    a = jax.random.normal(key, (n, m), jnp.float32)
    q, r = jnp.linalg.qr(a)                      # q: [n, m] with orthonormal cols
    d = jnp.sign(jnp.diagonal(r))
    q = q * d[None, :]
    if rows < cols:
        q = q.T                                  # -> [rows, cols] orthonormal rows
    return q[:rows, :cols]


if __name__ == "__main__":
    key = jax.random.PRNGKey(0)
    k_x, k_w = jax.random.split(key)

    # Small shapes consistent with the module: batch=2, num_features=32,
    # encoder feature map 8x8, num_classes=16, temperature=16.0.
    B, C, H, W = 2, 32, 8, 8
    num_classes = 16
    temperature = 16.0

    # TODO(synk): resnet20/resnet18 encoder bodies are not part of the provided
    # module source; `x` here stands for the encoder's output feature map (NCHW).
    x = jax.random.normal(k_x, (B, C, H, W), jnp.float32)
    fc_weight = orthogonal_init(k_w, (num_classes, C))   # nn.Linear(C, NC, bias=False)

    out = jax.block_until_ready(mics_forward(x, fc_weight, temperature))

    # Pure-JAX reference check of the original (mean-pool + normalize) semantics.
    pooled = jnp.mean(x.reshape(B, C, -1), axis=-1)
    f_hat = pooled / jnp.maximum(jnp.linalg.norm(pooled, axis=-1, keepdims=True), 1e-12)
    w_hat = fc_weight / jnp.maximum(
        jnp.linalg.norm(fc_weight, axis=-1, keepdims=True), 1e-12
    )
    ref = temperature * (f_hat @ w_hat.T)
    assert out.shape == (B, num_classes)
    assert jnp.allclose(out, ref, atol=1e-3, rtol=1e-4), (out, ref)

    print("KERNEL_OK")
</pallas_src>

<mosaic_0001>
module attributes {stable_mosaic.version = 11 : i64} {
  func.func @_mics_head_kernel(%arg0: i32, %arg1: memref<8x64x32xf32, #tpu.memory_space<vmem>>, %arg2: memref<32x128xf32, #tpu.memory_space<vmem>>, %arg3: memref<8x128xf32, #tpu.memory_space<vmem>>) attributes {dimension_semantics = [#tpu.dimension_semantics<parallel>], iteration_bounds = array<i64: 1>, scalar_prefetch = 0 : i64, scratch_operands = 0 : i64, tpu.core_type = #tpu.core_type<tc>, window_params = [{transform_indices = @transform_0, window_bounds = array<i64: 8, 64, 32>}, {pipeline_mode = #tpu.pipeline_mode<synchronous>, transform_indices = @transform_1, window_bounds = array<i64: 32, 128>}, {transform_indices = @transform_2, window_bounds = array<i64: 8, 128>}]} {
    %c0 = arith.constant 0 : index
    %c0_0 = arith.constant 0 : index
    %c0_1 = arith.constant 0 : index
    %0 = vector.load %arg1[%c0, %c0_0, %c0_1] : memref<8x64x32xf32, #tpu.memory_space<vmem>>, vector<8x64x32xf32>
    %cst = arith.constant dense<0.000000e+00> : vector<8x32xf32>
    %1 = vector.multi_reduction <add>, %0, %cst [1] : vector<8x64x32xf32> to vector<8x32xf32>
    %2 = arith.mulf %1, %1 : vector<8x32xf32>
    %cst_2 = arith.constant dense<0.000000e+00> : vector<8xf32>
    %3 = vector.multi_reduction <add>, %2, %cst_2 [1] : vector<8x32xf32> to vector<8xf32>
    %4 = vector.shape_cast %3 : vector<8xf32> to vector<8x1xf32>
    %cst_3 = arith.constant 1.000000e-24 : f32
    %5 = vector.broadcast %cst_3 : f32 to vector<8x1xf32>
    %6 = arith.maximumf %4, %5 : vector<8x1xf32>
    %7 = math.rsqrt %6 : vector<8x1xf32>
    %8 = vector.broadcast %7 : vector<8x1xf32> to vector<8x32xf32>
    %9 = arith.mulf %1, %8 : vector<8x32xf32>
    %c0_4 = arith.constant 0 : index
    %c0_5 = arith.constant 0 : index
    %10 = vector.load %arg2[%c0_4, %c0_5] : memref<32x128xf32, #tpu.memory_space<vmem>>, vector<32x128xf32>
    %11 = arith.mulf %10, %10 : vector<32x128xf32>
    %cst_6 = arith.constant dense<0.000000e+00> : vector<128xf32>
    %12 = vector.multi_reduction <add>, %11, %cst_6 [0] : vector<32x128xf32> to vector<128xf32>
    %13 = vector.shape_cast %12 : vector<128xf32> to vector<1x128xf32>
    %cst_7 = arith.constant 1.000000e-24 : f32
    %14 = vector.broadcast %cst_7 : f32 to vector<1x128xf32>
    %15 = arith.maximumf %13, %14 : vector<1x128xf32>
    %16 = math.rsqrt %15 : vector<1x128xf32>
    %cst_8 = arith.constant 1.600000e+01 : f32
    %17 = vector.broadcast %cst_8 : f32 to vector<1x128xf32>
    %18 = arith.mulf %17, %16 : vector<1x128xf32>
    %19 = vector.broadcast %18 : vector<1x128xf32> to vector<32x128xf32>
    %20 = arith.mulf %10, %19 : vector<32x128xf32>
    %cst_9 = arith.constant dense<0.000000e+00> : vector<8x128xf32>
    %21 = tpu.matmul %9, %20, %cst_9 {dimension_numbers = #tpu.dot_dimension_numbers<[1], [0], [0], [1], [0, 0, 1, 1], [], []>} : vector<8x32xf32>, vector<32x128xf32>, vector<8x128xf32> -> vector<8x128xf32>
    %c0_10 = arith.constant 0 : index
    %c0_11 = arith.constant 0 : index
    %22 = vector.load %arg3[%c0_10, %c0_11] : memref<8x128xf32, #tpu.memory_space<vmem>>, vector<8x128xf32>
    tpu.vector_store %arg3[%c0_10, %c0_11], %21 {strides = array<i32>} : memref<8x128xf32, #tpu.memory_space<vmem>>, vector<8x128xf32>,
    return
  }
  func.func @transform_0(%arg0: i32) -> (i32, i32, i32) {
    %c0_i32 = arith.constant 0 : i32
    %c0_i32_0 = arith.constant 0 : i32
    %c0_i32_1 = arith.constant 0 : i32
    return %arg0, %c0_i32, %c0_i32_0 : i32, i32, i32
  }
  func.func @transform_1(%arg0: i32) -> (i32, i32) {
    %c0_i32 = arith.constant 0 : i32
    %c0_i32_0 = arith.constant 0 : i32
    %c0_i32_1 = arith.constant 0 : i32
    return %c0_i32, %c0_i32_0 : i32, i32
  }
  func.func @transform_2(%arg0: i32) -> (i32, i32) {
    %c0_i32 = arith.constant 0 : i32
    %c0_i32_0 = arith.constant 0 : i32
    return %arg0, %c0_i32 : i32, i32
  }
}

</mosaic_0001>

<llo_original>
// kernel: tpu_custom_call.1
$region0: #{tpu_custom_call.1}
  #allocation0 [shape = 'u32[]', space=smem, size = 0x4, offset = 0x4, fixed_abs, tag = 'smem constant byte address 0x4 - core index']
  #allocation1 [shape = 'u32[144,128]{1,0:T(1,128)}', space=vmem, size = 0x12000, scoped, tag = 'internal scratch']
  %s0 = inlined_call_operand.vmem [shape: f32[8,64,32], index: 0, kind: input, shape index: {}]
  %s1 = inlined_call_operand.vmem [shape: f32[32,128], index: 1, kind: input, shape index: {}]
  %s2 = inlined_call_operand.hbm [shape: f32[8,128], index: 2, kind: output, shape index: {}]
  %s3 = sld [smem:[#allocation0]]
  $region18: #{tpu_custom_call.1} parent=0
    _
  %s5 = ssub.s32 1, %s3
  %s6 = scalar_select 0, %s5, %s3
  $region1: #{tpu_custom_call.1} parent=0
    #allocation2 [shape = 'u8[4096]{0}', space=vmem, size = 0x1000, scoped, tag = 'output window, operand 0, single buffered']
    #allocation3 [shape = 's32[1]{0}', space=sflag, size = 0x4, scoped, tag = 'scoped memory for tpu_custom_call.1']
    %7 = vsyncpa [#allocation3], 0
    // Predicated region
    $region2: #{tpu_custom_call.1} parent=1 // pred_check
      _
    $region3: #{tpu_custom_call.1} parent=1 // pred_check_branch
      %9 = sbr.rel (0) target = $region5
    $region4: #{tpu_custom_call.1} parent=1 // pred_region
      _
    $region5: #{tpu_custom_call.1} parent=1 // pred_fallthru
      _
    // Predicated region
    $region6: #{tpu_custom_call.1} parent=1 // pred_check
      _
    $region7: #{tpu_custom_call.1} parent=1 // pred_check_branch
      %11 = sbr.rel (0) target = $region9
    $region8: #{tpu_custom_call.1} parent=1 // pred_region
      _
    $region9: #{tpu_custom_call.1} parent=1 // pred_fallthru
      _
    %v12 = vld [vmem:[%s0] sm:$0xff]
    %v13 = vld [vmem:[%s0 + $0x8] sm:$0xff]
    %v14 = vld [vmem:[%s0 + $0x10] sm:$0xff]
    %v15 = vld [vmem:[%s0 + $0x18] sm:$0xff]
    %v16 = vld [vmem:[%s0 + $0x20] sm:$0xff]
    %v17 = vld [vmem:[%s0 + $0x28] sm:$0xff]
    %v18 = vld [vmem:[%s0 + $0x30] sm:$0xff]
    %v19 = vld [vmem:[%s0 + $0x38] sm:$0xff]
    %v20 = vld [vmem:[%s0 + $0x40] sm:$0xff]
    %v21 = vld [vmem:[%s0 + $0x48] sm:$0xff]
    %v22 = vld [vmem:[%s0 + $0x50] sm:$0xff]
    %v23 = vld [vmem:[%s0 + $0x58] sm:$0xff]
    %v24 = vld [vmem:[%s0 + $0x60] sm:$0xff]
    %v25 = vld [vmem:[%s0 + $0x68] sm:$0xff]
    %v26 = vld [vmem:[%s0 + $0x70] sm:$0xff]
    %v27 = vld [vmem:[%s0 + $0x78] sm:$0xff]
    %v28 = vld [vmem:[%s0 + $0x80] sm:$0xff]
    %v29 = vld [vmem:[%s0 + $0x88] sm:$0xff]
    %v30 = vld [vmem:[%s0 + $0x90] sm:$0xff]
    %v31 = vld [vmem:[%s0 + $0x98] sm:$0xff]
    %v32 = vld [vmem:[%s0 + $0xa0] sm:$0xff]
    %v33 = vld [vmem:[%s0 + $0xa8] sm:$0xff]
    %v34 = vld [vmem:[%s0 + $0xb0] sm:$0xff]
    %v35 = vld [vmem:[%s0 + $0xb8] sm:$0xff]
    %v36 = vld [vmem:[%s0 + $0xc0] sm:$0xff]
    %v37 = vld [vmem:[%s0 + $0xc8] sm:$0xff]
    %v38 = vld [vmem:[%s0 + $0xd0] sm:$0xff]
    %v39 = vld [vmem:[%s0 + $0xd8] sm:$0xff]
    %v40 = vld [vmem:[%s0 + $0xe0] sm:$0xff]
    %v41 = vld [vmem:[%s0 + $0xe8] sm:$0xff]
    %v42 = vld [vmem:[%s0 + $0xf0] sm:$0xff]
    %v43 = vld [vmem:[%s0 + $0xf8] sm:$0xff]
    %v44 = vld [vmem:[%s0 + $0x100] sm:$0xff]
    %v45 = vld [vmem:[%s0 + $0x108] sm:$0xff]
    %v46 = vld [vmem:[%s0 + $0x110] sm:$0xff]
    %v47 = vld [vmem:[%s0 + $0x118] sm:$0xff]
    %v48 = vld [vmem:[%s0 + $0x120] sm:$0xff]
    %v49 = vld [vmem:[%s0 + $0x128] sm:$0xff]
    %v50 = vld [vmem:[%s0 + $0x130] sm:$0xff]
    %v51 = vld [vmem:[%s0 + $0x138] sm:$0xff]
    %v52 = vld [vmem:[%s0 + $0x140] sm:$0xff]
    %v53 = vld [vmem:[%s0 + $0x148] sm:$0xff]
    %v54 = vld [vmem:[%s0 + $0x150] sm:$0xff]
    %v55 = vld [vmem:[%s0 + $0x158] sm:$0xff]
    %v56 = vld [vmem:[%s0 + $0x160] sm:$0xff]
    %v57 = vld [vmem:[%s0 + $0x168] sm:$0xff]
    %v58 = vld [vmem:[%s0 + $0x170] sm:$0xff]
    %v59 = vld [vmem:[%s0 + $0x178] sm:$0xff]
    %v60 = vld [vmem:[%s0 + $0x180] sm:$0xff]
    %v61 = vld [vmem:[%s0 + $0x188] sm:$0xff]
    %v62 = vld [vmem:[%s0 + $0x190] sm:$0xff]
    %v63 = vld [vmem:[%s0 + $0x198] sm:$0xff]
    %v64 = vld [vmem:[%s0 + $0x1a0] sm:$0xff]
    %v65 = vld [vmem:[%s0 + $0x1a8] sm:$0xff]
    %v66 = vld [vmem:[%s0 + $0x1b0] sm:$0xff]
    %v67 = vld [vmem:[%s0 + $0x1b8] sm:$0xff]
    %v68 = vld [vmem:[%s0 + $0x1c0] sm:$0xff]
    %v69 = vld [vmem:[%s0 + $0x1c8] sm:$0xff]
    %v70 = vld [vmem:[%s0 + $0x1d0] sm:$0xff]
    %v71 = vld [vmem:[%s0 + $0x1d8] sm:$0xff]
    %v72 = vld [vmem:[%s0 + $0x1e0] sm:$0xff]
    %v73 = vld [vmem:[%s0 + $0x1e8] sm:$0xff]
    %v74 = vld [vmem:[%s0 + $0x1f0] sm:$0xff]
    %v75 = vld [vmem:[%s0 + $0x1f8] sm:$0xff]
    %vm76 = vcmask 261120
    %v77 = vsel %vm76, %v12, 0.0
    %v78 = vsel %vm76, %v13, 0.0
    %v79 = vadd.f32 %v77, %v78
    %v80 = vsel %vm76, %v14, 0.0
    %v81 = vadd.f32 %v79, %v80
    %v82 = vsel %vm76, %v15, 0.0
    %v83 = vadd.f32 %v81, %v82
    %v84 = vsel %vm76, %v16, 0.0
    %v85 = vadd.f32 %v83, %v84
    %v86 = vsel %vm76, %v17, 0.0
    %v87 = vadd.f32 %v85, %v86
    %v88 = vsel %vm76, %v18, 0.0
    %v89 = vadd.f32 %v87, %v88
    %v90 = vsel %vm76, %v19, 0.0
    %v91 = vadd.f32 %v89, %v90
    %v92 = vrot.slane %v91, 4
    %v93 = vadd.f32 %v91, %v92
    %v94 = vrot.slane %v93, 2
    %v95 = vadd.f32 %v93, %v94
    %v96 = vrot.slane %v95, 1
    %v97 = vadd.f32 %v95, %v96
    %v98 = vsel %vm76, %v20, 0.0
    %v99 = vsel %vm76, %v21, 0.0
    %v100 = vadd.f32 %v98, %v99
    %v101 = vsel %vm76, %v22, 0.0
    %v102 = vadd.f32 %v100, %v101
    %v103 = vsel %vm76, %v23, 0.0
    %v104 = vadd.f32 %v102, %v103
    %v105 = vsel %vm76, %v24, 0.0
    %v106 = vadd.f32 %v104, %v105
    %v107 = vsel %vm76, %v25, 0.0
    %v108 = vadd.f32 %v106, %v107
    %v109 = vsel %vm76, %v26, 0.0
    %v110 = vadd.f32 %v108, %v109
    %v111 = vsel %vm76, %v27, 0.0
    %v112 = vadd.f32 %v110, %v111
    %v113 = vrot.slane %v112, 4
    %v114 = vadd.f32 %v112, %v113
    %v115 = vrot.slane %v114, 2
    %v116 = vadd.f32 %v114, %v115
    %v117 = vrot.slane %v116, 1
    %v118 = vadd.f32 %v116, %v117
    %v119 = vsel %vm76, %v28, 0.0
    %v120 = vsel %vm76, %v29, 0.0
    %v121 = vadd.f32 %v119, %v120
    %v122 = vsel %vm76, %v30, 0.0
    %v123 = vadd.f32 %v121, %v122
    %v124 = vsel %vm76, %v31, 0.0
    %v125 = vadd.f32 %v123, %v124
    %v126 = vsel %vm76, %v32, 0.0
    %v127 = vadd.f32 %v125, %v126
    %v128 = vsel %vm76, %v33, 0.0
    %v129 = vadd.f32 %v127, %v128
    %v130 = vsel %vm76, %v34, 0.0
    %v131 = vadd.f32 %v129, %v130
    %v132 = vsel %vm76, %v35, 0.0
    %v133 = vadd.f32 %v131, %v132
    %v134 = vrot.slane %v133, 4
    %v135 = vadd.f32 %v133, %v134
    %v136 = vrot.slane %v135, 2
    %v137 = vadd.f32 %v135, %v136
    %v138 = vrot.slane %v137, 1
    %v139 = vadd.f32 %v137, %v138
    %v140 = vsel %vm76, %v36, 0.0
    %v141 = vsel %vm76, %v37, 0.0
    %v142 = vadd.f32 %v140, %v141
    %v143 = vsel %vm76, %v38, 0.0
    %v144 = vadd.f32 %v142, %v143
    %v145 = vsel %vm76, %v39, 0.0
    %v146 = vadd.f32 %v144, %v145
    %v147 = vsel %vm76, %v40, 0.0
    %v148 = vadd.f32 %v146, %v147
    %v149 = vsel %vm76, %v41, 0.0
    %v150 = vadd.f32 %v148, %v149
    %v151 = vsel %vm76, %v42, 0.0
    %v152 = vadd.f32 %v150, %v151
    %v153 = vsel %vm76, %v43, 0.0
    %v154 = vadd.f32 %v152, %v153
    %v155 = vrot.slane %v154, 4
    %v156 = vadd.f32 %v154, %v155
    %v157 = vrot.slane %v156, 2
    %v158 = vadd.f32 %v156, %v157
    %v159 = vrot.slane %v158, 1
    %v160 = vadd.f32 %v158, %v159
    %v161 = vsel %vm76, %v44, 0.0
    %v162 = vsel %vm76, %v45, 0.0
    %v163 = vadd.f32 %v161, %v162
    %v164 = vsel %vm76, %v46, 0.0
    %v165 = vadd.f32 %v163, %v164
    %v166 = vsel %vm76, %v47, 0.0
    %v167 = vadd.f32 %v165, %v166
    %v168 = vsel %vm76, %v48, 0.0
    %v169 = vadd.f32 %v167, %v168
    %v170 = vsel %vm76, %v49, 0.0
    %v171 = vadd.f32 %v169, %v170
    %v172 = vsel %vm76, %v50, 0.0
    %v173 = vadd.f32 %v171, %v172
    %v174 = vsel %vm76, %v51, 0.0
    %v175 = vadd.f32 %v173, %v174
    %v176 = vrot.slane %v175, 4
    %v177 = vadd.f32 %v175, %v176
    %v178 = vrot.slane %v177, 2
    %v179 = vadd.f32 %v177, %v178
    %v180 = vrot.slane %v179, 1
    %v181 = vadd.f32 %v179, %v180
    %v182 = vsel %vm76, %v52, 0.0
    %v183 = vsel %vm76, %v53, 0.0
    %v184 = vadd.f32 %v182, %v183
    %v185 = vsel %vm76, %v54, 0.0
    %v186 = vadd.f32 %v184, %v185
    %v187 = vsel %vm76, %v55, 0.0
    %v188 = vadd.f32 %v186, %v187
    %v189 = vsel %vm76, %v56, 0.0
    %v190 = vadd.f32 %v188, %v189
    %v191 = vsel %vm76, %v57, 0.0
    %v192 = vadd.f32 %v190, %v191
    %v193 = vsel %vm76, %v58, 0.0
    %v194 = vadd.f32 %v192, %v193
    %v195 = vsel %vm76, %v59, 0.0
    %v196 = vadd.f32 %v194, %v195
    %v197 = vrot.slane %v196, 4
    %v198 = vadd.f32 %v196, %v197
    %v199 = vrot.slane %v198, 2
    %v200 = vadd.f32 %v198, %v199
    %v201 = vrot.slane %v200, 1
    %v202 = vadd.f32 %v200, %v201
    %v203 = vsel %vm76, %v60, 0.0
    %v204 = vsel %vm76, %v61, 0.0
    %v205 = vadd.f32 %v203, %v204
    %v206 = vsel %vm76, %v62, 0.0
    %v207 = vadd.f32 %v205, %v206
    %v208 = vsel %vm76, %v63, 0.0
    %v209 = vadd.f32 %v207, %v208
    %v210 = vsel %vm76, %v64, 0.0
    %v211 = vadd.f32 %v209, %v210
    %v212 = vsel %vm76, %v65, 0.0
    %v213 = vadd.f32 %v211, %v212
    %v214 = vsel %vm76, %v66, 0.0
    %v215 = vadd.f32 %v213, %v214
    %v216 = vsel %vm76, %v67, 0.0
    %v217 = vadd.f32 %v215, %v216
    %v218 = vrot.slane %v217, 4
    %v219 = vadd.f32 %v217, %v218
    %v220 = vrot.slane %v219, 2
    %v221 = vadd.f32 %v219, %v220
    %v222 = vrot.slane %v221, 1
    %v223 = vadd.f32 %v221, %v222
    %v224 = vsel %vm76, %v68, 0.0
    %v225 = vsel %vm76, %v69, 0.0
    %v226 = vadd.f32 %v224, %v225
    %v227 = vsel %vm76, %v70, 0.0
    %v228 = vadd.f32 %v226, %v227
    %v229 = vsel %vm76, %v71, 0.0
    %v230 = vadd.f32 %v228, %v229
    %v231 = vsel %vm76, %v72, 0.0
    %v232 = vadd.f32 %v230, %v231
    %v233 = vsel %vm76, %v73, 0.0
    %v234 = vadd.f32 %v232, %v233
    %v235 = vsel %vm76, %v74, 0.0
    %v236 = vadd.f32 %v234, %v235
    %v237 = vsel %vm76, %v75, 0.0
    %v238 = vadd.f32 %v236, %v237
    %v239 = vrot.slane %v238, 4
    %v240 = vadd.f32 %v238, %v239
    %v241 = vrot.slane %v240, 2
    %v242 = vadd.f32 %v240, %v241
    %v243 = vrot.slane %v242, 1
    %v244 = vadd.f32 %v242, %v243
    %v245 = vmul.f32 %v97, %v97
    %v246 = vmul.f32 %v118, %v118
    %v247 = vmul.f32 %v139, %v139
    %v248 = vmul.f32 %v160, %v160
    %v249 = vmul.f32 %v181, %v181
    %v250 = vmul.f32 %v202, %v202
    %v251 = vmul.f32 %v223, %v223
    %v252 = vmul.f32 %v244, %v244
    %vm261 = vcmask 1041409
    %v262 = vsel %vm261, %v246, %v245
    %vm263 = vcmask 1042434
    %v264 = vsel %vm263, %v247, %v262
    %vm265 = vcmask 1043459
    %v266 = vsel %vm265, %v248, %v264
    %vm267 = vcmask 1044484
    %v268 = vsel %vm267, %v249, %v266
    %vm269 = vcmask 1045509
    %v270 = vsel %vm269, %v250, %v268
    %vm271 = vcmask 1046534
    %v272 = vsel %vm271, %v251, %v270
    %vm273 = vcmask 1047559
    %v274 = vsel %vm273, %v252, %v272
    %v276 = vsel %vm76, %v274, 0.0
    %277 = vadd.xlane.f32.xlu0 %v276
    %v278 = vpop.xlane.xlu0 %277
    %v279 = vmax.f32 %v278, 1e-24
    %v280 = vrsqrt.pop %v279
    %v282 = vrot.slane %v280, 1
    %v283 = vrot.slane %v280, 2
    %v284 = vrot.slane %v280, 3
    %v285 = vrot.slane %v280, 4
    %v286 = vrot.slane %v280, 5
    %v287 = vrot.slane %v280, 6
    %v288 = vrot.slane %v280, 7
    %v297 = vmul.f32 %v97, %v280
    %v298 = vmul.f32 %v118, %v282
    %v299 = vmul.f32 %v139, %v283
    %v300 = vmul.f32 %v160, %v284
    %v301 = vmul.f32 %v181, %v285
    %v302 = vmul.f32 %v202, %v286
    %v303 = vmul.f32 %v223, %v287
    %v304 = vmul.f32 %v244, %v288
    %v305 = vld [vmem:[%s1] sm:$0xff]
    %v306 = vld [vmem:[%s1 + $0x8] sm:$0xff]
    %v307 = vld [vmem:[%s1 + $0x10] sm:$0xff]
    %v308 = vld [vmem:[%s1 + $0x18] sm:$0xff]
    %v309 = vmul.f32 %v305, %v305
    %v310 = vmul.f32 %v306, %v306
    %v311 = vmul.f32 %v307, %v307
    %v312 = vmul.f32 %v308, %v308
    %v313 = vadd.f32 %v309, %v310
    %v314 = vadd.f32 %v313, %v311
    %v315 = vadd.f32 %v314, %v312
    %v316 = vrot.slane %v315, 4
    %v317 = vadd.f32 %v315, %v316
    %v318 = vrot.slane %v317, 2
    %v319 = vadd.f32 %v317, %v318
    %v320 = vrot.slane %v319, 1
    %v321 = vadd.f32 %v319, %v320
    %v322 = vmax.f32 %v321, 1e-24
    %v323 = vrsqrt.pop %v322
    %v324 = vmul.f32 %v323, 16.0
    %v325 = vmul.f32 %v305, %v324
    %v326 = vmul.f32 %v306, %v324
    %v327 = vmul.f32 %v307, %v324
    %v328 = vmul.f32 %v308, %v324
    %v337 = vrot.slane %v298, 7
    %v338 = vsel %vm261, %v337, %v297
    %v339 = vrot.slane %v299, 6
    %v340 = vsel %vm263, %v339, %v338
    %v341 = vrot.slane %v300, 5
    %v342 = vsel %vm265, %v341, %v340
    %v343 = vrot.slane %v301, 4
    %v344 = vsel %vm267, %v343, %v342
    %v345 = vrot.slane %v302, 3
    %v346 = vsel %vm269, %v345, %v344
    %v347 = vrot.slane %v303, 2
    %v348 = vsel %vm271, %v347, %v346
    %v349 = vrot.slane %v304, 1
    %v350 = vsel %vm273, %v349, %v348
    %v351 = vsel %vm76, %v350, 0
    %353 = vmatprep.subr.mxu0 0.0
    %354 = vmatpush1.msra.mxu0 %v325
    %355 = vmatprep.subr.mxu0 0.0
    %356 = vmatpush1.msra.mxu0 %v326
    %357 = vmatprep.subr.mxu0 0.0
    %358 = vmatpush1.msra.mxu0 %v327
    %359 = vmatprep.subr.mxu0 0.0
    %360 = vmatpush1.msra.mxu0 %v328
    %361 = vmatprep.subr.mxu0 0.0
    %362 = vmatpush1.msra.mxu0 0.0
    %363 = vmatprep.subr.mxu0 0.0
    %364 = vmatpush1.msra.mxu0 0.0
    %365 = vmatprep.subr.mxu0 0.0
    %366 = vmatpush1.msra.mxu0 0.0
    %367 = vmatprep.subr.mxu0 0.0
    %368 = vmatpush1.msra.mxu0 0.0
    %369 = vmatprep.subr.mxu0 0.0
    %370 = vmatpush1.msra.mxu0 0.0
    %371 = vmatprep.subr.mxu0 0.0
    %372 = vmatpush1.msra.mxu0 0.0
    %373 = vmatprep.subr.mxu0 0.0
    %374 = vmatpush1.msra.mxu0 0.0
    %375 = vmatprep.subr.mxu0 0.0
    %376 = vmatpush1.msra.mxu0 0.0
    %377 = vmatprep.subr.mxu0 0.0
    %378 = vmatpush1.msra.mxu0 0.0
    %379 = vmatprep.subr.mxu0 0.0
    %380 = vmatpush1.msra.mxu0 0.0
    %381 = vmatprep.subr.mxu0 0.0
    %382 = vmatpush1.msra.mxu0 0.0
    %383 = vmatprep.subr.mxu0 0.0
    %384 = vmatpush1.msra.mxu0 0.0
    %385 = vmatprep.subr.mxu0 0.0
    %386 = vmatpush1.msra.mxu0 0.0
    %387 = vmatprep.subr.mxu0 0.0
    %388 = vmatpush1.msra.mxu0 0.0
    %389 = vmatprep.subr.mxu0 0.0
    %390 = vmatpush1.msra.mxu0 0.0
    %391 = vmatprep.subr.mxu0 0.0
    %392 = vmatpush1.msra.mxu0 0.0
    %393 = vmatprep.subr.mxu0 0.0
    %394 = vmatpush1.msra.mxu0 0.0
    %395 = vmatprep.subr.mxu0 0.0
    %396 = vmatpush1.msra.mxu0 0.0
    %397 = vmatprep.subr.mxu0 0.0
    %398 = vmatpush1.msra.mxu0 0.0
    %399 = vmatprep.subr.mxu0 0.0
    %400 = vmatpush1.msra.mxu0 0.0
    %401 = vmatprep.subr.mxu0 0.0
    %402 = vmatpush1.msra.mxu0 0.0
    %403 = vmatprep.subr.mxu0 0.0
    %404 = vmatpush1.msra.mxu0 0.0
    %405 = vmatprep.subr.mxu0 0.0
    %406 = vmatpush1.msra.mxu0 0.0
    %407 = vmatprep.subr.mxu0 0.0
    %408 = vmatpush1.msra.mxu0 0.0
    %409 = vmatprep.subr.mxu0 0.0
    %410 = vmatpush1.msra.mxu0 0.0
    %411 = vmatprep.subr.mxu0 0.0
    %412 = vmatpush1.msra.mxu0 0.0
    %413 = vmatprep.subr.mxu0 0.0
    %414 = vmatpush1.msra.mxu0 0.0
    %415 = vmatprep.subr.mxu0 0.0
    %416 = vmatpush1.msra.mxu0 0.0
    %417 = vmatprep.mubr.f32.mxu0 0.0
    %418 = vmatmul.mubr.f32.gmra.mrb[0].mxu0 %v351
    %v419 = vpop.f32.mrb[0].mxu0
    %v420 = vadd.f32 0.0, %v419
    %v421 = vpop.f32.mrb[0].mxu0
    %422 = vdwg.mxu0
    %423 = vst [vmem:[#allocation2] sm:$0xff] %v420
    // Predicated region
    $region10: #{tpu_custom_call.1} parent=1 // pred_check
      _
    $region11: #{tpu_custom_call.1} parent=1 // pred_check_branch
      %425 = sbr.rel (0) target = $region13
    $region12: #{tpu_custom_call.1} parent=1 // pred_region
      %s427 = ssub.s32 128, 128
      %428 = vsyncadd [#allocation3], %s427
      %s430 = sshll.u32 [#allocation2], 4
      %s431 = int_to_ptr.vmem [resolvable:$true] %s430
      %433 = dma.vmem_to_hbm [thread:$0]  %s431, 128, %s2, [#allocation3]
    $region13: #{tpu_custom_call.1} parent=1 // pred_fallthru
      _
    // Predicated region
    $region14: #{tpu_custom_call.1} parent=1 // pred_check
      _
    $region15: #{tpu_custom_call.1} parent=1 // pred_check_branch
      %435 = sbr.rel (0) target = $region17
    $region16: #{tpu_custom_call.1} parent=1 // pred_region
      %436 = dma.done [#allocation3], 128
    $region17: #{tpu_custom_call.1} parent=1 // pred_fallthru
      _
    %437 = vsyncpa [#allocation3], 1

</llo_original>
